<compile_context>
chip_gen: v6e
topology: v6e:2x2x1
jax: 0.10.0
libtpu: 0.0.40
codegen_flags: <defaults>
</compile_context>

<pallas_src>
import functools

import jax
import jax.numpy as jnp
from jax.experimental import pallas as pl
from jax.experimental.pallas import tpu as pltpu


def _rmsnorm_kernel(x_ref, w_ref, o_ref, *, eps):
    # x_ref: (br, D) tile of rows; w_ref: (1, D) weight (resident, constant index_map).
    # Pass 1: sum of squares in f32 (upcast happens per-vreg inside the reduce;
    # we do not keep a full (br, D) f32 temp live across both passes).
    xf = x_ref[...].astype(jnp.float32)
    ms = jnp.mean(xf * xf, axis=-1, keepdims=True)        # x.pow(2).mean(-1, keepdim=True)
    inv = jax.lax.rsqrt(ms + eps)                         # rsqrt(... + eps) on the EUP
    # Pass 2: re-read the tile, normalize, cast to x.dtype BEFORE the weight
    # multiply — matches PyTorch: _norm(x.float()).type_as(x) * weight.
    normed = (x_ref[...].astype(jnp.float32) * inv).astype(o_ref.dtype)
    o_ref[...] = (normed * w_ref[...]).astype(o_ref.dtype)


def _vmem_capacity_bytes():
    """Physical VMEM per TensorCore; conservative fallback if the query fails."""
    try:
        return int(pltpu.get_tpu_info().vmem_capacity_bytes)
    except Exception:
        return 64 * 1024 * 1024   # v7x per-TC capacity (most restrictive)


def _round_up8(n):
    return ((n + 7) // 8) * 8


def _choose_block_rows(rows, d_model, x_itemsize, vmem_cap, requested):
    """Pick a row-tile size that fits the VMEM budget and load-balances splits."""
    # Per-row VMEM cost: double-buffered input + output tiles plus one f32
    # working row of headroom for in-flight upcasts / compiler scratch.
    per_row = 2 * (x_itemsize + x_itemsize) * d_model + 4 * d_model
    tile_budget = int(vmem_cap * 0.55)           # leave headroom for Mosaic scratch
    fit_rows = max(8, (tile_budget // per_row) // 8 * 8)

    br_max = max(8, min(requested, fit_rows))

    if rows <= br_max:
        # Whole problem in one tile: no forced split (a split buys nothing on
        # 1-TC chips and the input is tiny anyway).
        return rows

    # Multiple tiles: balance them.  Round the step count up to an even number
    # so the two v7x TensorCores (dimension_semantics="parallel") get equal
    # work; on 1-TC chips this costs at most one extra ~0.35us step boundary.
    steps = pl.cdiv(rows, br_max)
    if steps % 2 == 1:
        steps += 1
    br = min(br_max, _round_up8(pl.cdiv(rows, steps)))
    return max(8, br)


def rmsnorm(x, weight, eps=1e-6, block_rows=1024):
    """x: (..., d_model), weight: (d_model,). Returns same shape/dtype as x.

    Semantics match the PyTorch module: normalize in f32, cast back to x.dtype,
    then multiply by weight.  For best write-back performance d_model should be
    a multiple of 128 (true for real model dims); other sizes still work.
    """
    orig_shape = x.shape
    d_model = orig_shape[-1]
    x2d = x.reshape(-1, d_model)
    rows = x2d.shape[0]
    w2d = weight.reshape(1, d_model)

    x_item = jnp.dtype(x2d.dtype).itemsize
    w_item = jnp.dtype(weight.dtype).itemsize

    vmem_cap = _vmem_capacity_bytes()
    br = _choose_block_rows(rows, d_model, x_item, vmem_cap, block_rows)
    grid = (pl.cdiv(rows, br),)     # ragged last tile handled by Pallas

    # Scoped VMEM limit: double-buffered in + out tiles, one f32 working tile,
    # the weight row, plus 25% slack — clamped to ~80% of *physical* capacity
    # (never request more VMEM than the chip has, e.g. 64 MiB on v7x).
    tile_bytes = br * d_model * x_item
    needed = 4 * tile_bytes + br * d_model * 4 + d_model * w_item
    vmem_limit = int(min(max(needed * 5 // 4, 32 * 1024 * 1024),
                         int(vmem_cap * 0.8)))

    # Pure bandwidth kernel: tell XLA the byte count so it can schedule
    # neighbouring ops (e.g. the next matmul's weight prefetch) around it.
    cost = pl.CostEstimate(
        flops=4 * rows * d_model,
        transcendentals=rows,
        bytes_accessed=2 * rows * d_model * x_item + d_model * w_item,
    )

    out = pl.pallas_call(
        functools.partial(_rmsnorm_kernel, eps=eps),
        out_shape=jax.ShapeDtypeStruct((rows, d_model), x2d.dtype),
        grid_spec=pltpu.PrefetchScalarGridSpec(
            num_scalar_prefetch=0,
            grid=grid,
            in_specs=[
                pl.BlockSpec((br, d_model), lambda i: (i, 0)),
                pl.BlockSpec((1, d_model), lambda i: (0, 0)),   # weight stays resident
            ],
            out_specs=pl.BlockSpec((br, d_model), lambda i: (i, 0)),
        ),
        compiler_params=pltpu.CompilerParams(
            dimension_semantics=("parallel",),
            vmem_limit_bytes=vmem_limit,
        ),
        cost_estimate=cost,
    )(x2d, w2d)
    return out.reshape(orig_shape)


def rmsnorm_ref(x, weight, eps=1e-6):
    # Faithful to the PyTorch module: norm in f32, cast to x.dtype, then * weight.
    xf = x.astype(jnp.float32)
    normed = (xf * jax.lax.rsqrt(jnp.mean(xf * xf, axis=-1, keepdims=True) + eps)
              ).astype(x.dtype)
    return (normed * weight).astype(x.dtype)


if __name__ == "__main__":
    key = jax.random.PRNGKey(0)
    # Small but lane-dense test shape (d_model multiple of 128).
    batch, seq, d_model = 2, 8, 128
    x = jax.random.normal(key, (batch, seq, d_model), dtype=jnp.float32)
    # matches nn.Parameter(torch.ones(d_model))
    weight = jnp.ones((d_model,), dtype=jnp.float32)

    out = jax.block_until_ready(rmsnorm(x, weight))
    ref = rmsnorm_ref(x, weight)

    assert out.shape == x.shape and out.dtype == x.dtype
    assert jnp.allclose(out, ref, atol=1e-5, rtol=1e-5), "mismatch vs reference"
    print("KERNEL_OK")
</pallas_src>

<mosaic_0001>
module attributes {stable_mosaic.version = 11 : i64} {
  func.func @_rmsnorm_kernel(%arg0: i32, %arg1: memref<16x128xf32, #tpu.memory_space<vmem>>, %arg2: memref<1x128xf32, #tpu.memory_space<vmem>>, %arg3: memref<16x128xf32, #tpu.memory_space<vmem>>) attributes {dimension_semantics = [#tpu.dimension_semantics<parallel>], iteration_bounds = array<i64: 1>, scalar_prefetch = 0 : i64, scratch_operands = 0 : i64, tpu.core_type = #tpu.core_type<tc>, window_params = [{transform_indices = @transform_0, window_bounds = array<i64: 16, 128>}, {pipeline_mode = #tpu.pipeline_mode<synchronous>, transform_indices = @transform_1, window_bounds = array<i64: 1, 128>}, {transform_indices = @transform_2, window_bounds = array<i64: 16, 128>}]} {
    %c0 = arith.constant 0 : index
    %c0_0 = arith.constant 0 : index
    %0 = vector.load %arg1[%c0, %c0_0] : memref<16x128xf32, #tpu.memory_space<vmem>>, vector<16x128xf32>
    %1 = arith.mulf %0, %0 : vector<16x128xf32>
    %cst = arith.constant dense<0.000000e+00> : vector<16xf32>
    %2 = vector.multi_reduction <add>, %1, %cst [1] : vector<16x128xf32> to vector<16xf32>
    %3 = vector.shape_cast %2 : vector<16xf32> to vector<16x1xf32>
    %cst_1 = arith.constant 1.280000e+02 : f32
    %4 = vector.broadcast %cst_1 : f32 to vector<16x1xf32>
    %5 = arith.divf %3, %4 : vector<16x1xf32>
    %cst_2 = arith.constant 9.99999997E-7 : f32
    %6 = vector.broadcast %cst_2 : f32 to vector<16x1xf32>
    %7 = arith.addf %5, %6 : vector<16x1xf32>
    %8 = math.rsqrt %7 : vector<16x1xf32>
    %c0_3 = arith.constant 0 : index
    %c0_4 = arith.constant 0 : index
    %9 = vector.load %arg1[%c0_3, %c0_4] : memref<16x128xf32, #tpu.memory_space<vmem>>, vector<16x128xf32>
    %10 = vector.broadcast %8 : vector<16x1xf32> to vector<16x128xf32>
    %11 = arith.mulf %9, %10 : vector<16x128xf32>
    %c0_5 = arith.constant 0 : index
    %c0_6 = arith.constant 0 : index
    %12 = vector.load %arg2[%c0_5, %c0_6] : memref<1x128xf32, #tpu.memory_space<vmem>>, vector<1x128xf32>
    %13 = vector.broadcast %12 : vector<1x128xf32> to vector<16x128xf32>
    %14 = arith.mulf %11, %13 : vector<16x128xf32>
    %c0_7 = arith.constant 0 : index
    %c0_8 = arith.constant 0 : index
    %15 = vector.load %arg3[%c0_7, %c0_8] : memref<16x128xf32, #tpu.memory_space<vmem>>, vector<16x128xf32>
    tpu.vector_store %arg3[%c0_7, %c0_8], %14 {strides = array<i32>} : memref<16x128xf32, #tpu.memory_space<vmem>>, vector<16x128xf32>,
    return
  }
  func.func @transform_0(%arg0: i32) -> (i32, i32) {
    %c0_i32 = arith.constant 0 : i32
    %c0_i32_0 = arith.constant 0 : i32
    return %arg0, %c0_i32 : i32, i32
  }
  func.func @transform_1(%arg0: i32) -> (i32, i32) {
    %c0_i32 = arith.constant 0 : i32
    %c0_i32_0 = arith.constant 0 : i32
    %c0_i32_1 = arith.constant 0 : i32
    return %c0_i32, %c0_i32_0 : i32, i32
  }
  func.func @transform_2(%arg0: i32) -> (i32, i32) {
    %c0_i32 = arith.constant 0 : i32
    %c0_i32_0 = arith.constant 0 : i32
    return %arg0, %c0_i32 : i32, i32
  }
}

</mosaic_0001>

<llo_original>
// kernel: tpu_custom_call.1
$region0: #{tpu_custom_call.1}
  #allocation0 [shape = 'u32[]', space=smem, size = 0x4, offset = 0x4, fixed_abs, tag = 'smem constant byte address 0x4 - core index']
  #allocation1 [shape = 'u32[144,128]{1,0:T(1,128)}', space=vmem, size = 0x12000, scoped, tag = 'internal scratch']
  %s0 = inlined_call_operand.hbm [shape: f32[16,128], index: 0, kind: input, shape index: {}]
  %s1 = inlined_call_operand.vmem [shape: f32[1,128], index: 1, kind: input, shape index: {}]
  %s2 = inlined_call_operand.hbm [shape: f32[16,128], index: 2, kind: output, shape index: {}]
  %s3 = sld [smem:[#allocation0]]
  $region22: #{tpu_custom_call.1} parent=0
    _
  %s5 = ssub.s32 1, %s3
  %s6 = scalar_select 0, %s5, %s3
  $region1: #{tpu_custom_call.1} parent=0
    #allocation2 [shape = 'u8[8192]{0}', space=vmem, size = 0x2000, scoped, tag = 'input window, operand 0, single buffered']
    #allocation3 [shape = 's32[1]{0}', space=sflag, size = 0x4, scoped, tag = 'scoped memory for tpu_custom_call.1']
    #allocation4 [shape = 's32[1]{0}', space=sflag, size = 0x4, scoped, tag = 'scoped memory for tpu_custom_call.1']
    #allocation5 [shape = 'u8[8192]{0}', space=vmem, size = 0x2000, scoped, tag = 'output window, operand 0, single buffered']
    %7 = vsyncpa [#allocation3], 0
    %8 = vsyncpa [#allocation4], 0
    // Predicated region
    $region2: #{tpu_custom_call.1} parent=1 // pred_check
      _
    $region3: #{tpu_custom_call.1} parent=1 // pred_check_branch
      %10 = sbr.rel (0) target = $region5
    $region4: #{tpu_custom_call.1} parent=1 // pred_region
      %s12 = ssub.s32 256, 256
      %13 = vsyncadd [#allocation3], %s12
      %s14 = sshll.u32 [#allocation2], 4
      %s15 = int_to_ptr.vmem [resolvable:$true] %s14
      %20 = dma.hbm_to_vmem [thread:$0]  %s0, 256, %s15, [#allocation3], 128, 128, 8
    $region5: #{tpu_custom_call.1} parent=1 // pred_fallthru
      _
    // Predicated region
    $region6: #{tpu_custom_call.1} parent=1 // pred_check
      _
    $region7: #{tpu_custom_call.1} parent=1 // pred_check_branch
      %22 = sbr.rel (0) target = $region9
    $region8: #{tpu_custom_call.1} parent=1 // pred_region
      _
    $region9: #{tpu_custom_call.1} parent=1 // pred_fallthru
      _
    // Predicated region
    $region10: #{tpu_custom_call.1} parent=1 // pred_check
      _
    $region11: #{tpu_custom_call.1} parent=1 // pred_check_branch
      %24 = sbr.rel (0) target = $region13
    $region12: #{tpu_custom_call.1} parent=1 // pred_region
      %25 = dma.done [#allocation3], 256
    $region13: #{tpu_custom_call.1} parent=1 // pred_fallthru
      _
    %v26 = vld [vmem:[#allocation2] sm:$0xff]
    %v27 = vld [vmem:[#allocation2 + $0x8] sm:$0xff]
    %v28 = vmul.f32 %v26, %v26
    %v29 = vmul.f32 %v27, %v27
    %30 = vadd.xlane.f32.xlu0 %v28
    %v31 = vpop.xlane.xlu0 %30
    %32 = vadd.xlane.f32.xlu0 %v29
    %v33 = vpop.xlane.xlu0 %32
    %v34 = vrcp.pop 128.0
    %v35 = vmul.f32 %v31, %v34
    %v36 = vmul.f32 %v33, %v34
    %v37 = vadd.f32 %v35, 1e-06
    %v38 = vadd.f32 %v36, 1e-06
    %v39 = vrsqrt.pop %v37
    %v40 = vrsqrt.pop %v38
    %v41 = vmul.f32 %v26, %v39
    %v42 = vmul.f32 %v27, %v40
    %v43 = vld [vmem:[%s1] sm:$0x1]
    %v45 = vlaneseq
    %v46 = vshrl.u32 %v45, 7
    %v47 = vsub.s32 0, %v46
    %v48 = vrot.slane %v43, %v47
    %v50 = vmul.f32 %v41, %v48
    %v51 = vmul.f32 %v42, %v48
    %52 = vst [vmem:[#allocation5] sm:$0xff] %v50
    %53 = vst [vmem:[#allocation5 + $0x8] sm:$0xff] %v51
    // Predicated region
    $region14: #{tpu_custom_call.1} parent=1 // pred_check
      _
    $region15: #{tpu_custom_call.1} parent=1 // pred_check_branch
      %55 = sbr.rel (0) target = $region17
    $region16: #{tpu_custom_call.1} parent=1 // pred_region
      %s57 = ssub.s32 256, 256
      %58 = vsyncadd [#allocation4], %s57
      %s59 = sshll.u32 [#allocation5], 4
      %s60 = int_to_ptr.vmem [resolvable:$true] %s59
      %65 = dma.vmem_to_hbm [thread:$0]  %s60, 256, %s2, [#allocation4], 128, 128, 8
    $region17: #{tpu_custom_call.1} parent=1 // pred_fallthru
      _
    // Predicated region
    $region18: #{tpu_custom_call.1} parent=1 // pred_check
      _
    $region19: #{tpu_custom_call.1} parent=1 // pred_check_branch
      %67 = sbr.rel (0) target = $region21
    $region20: #{tpu_custom_call.1} parent=1 // pred_region
      %68 = dma.done [#allocation4], 256
    $region21: #{tpu_custom_call.1} parent=1 // pred_fallthru
      _
    %69 = vsyncpa [#allocation3], 1
    %70 = vsyncpa [#allocation4], 1

</llo_original>
